<compile_context>
chip_gen: v5e
topology: v5e:2x2
jax: 0.10.0
libtpu: 0.0.40
codegen_flags: <defaults>
</compile_context>

<pallas_src>
import jax
import jax.numpy as jnp
from jax.experimental import pallas as pl
from jax.experimental.pallas import tpu as pltpu


def _pad_dim(d):
    """Lane-dense padding: 128 for small dims; 256-multiples for dims >= 128
    (v6e/v7x MXUs are 256-wide; v5e's 128-wide MXU is unaffected for small d)."""
    if d <= 128:
        return 128
    return ((d + 255) // 256) * 256


def _pad2(a, rows, cols, dtype):
    a = a.astype(dtype)
    pr, pc = rows - a.shape[0], cols - a.shape[1]
    if pr or pc:
        a = jnp.pad(a, ((0, pr), (0, pc)))
    return a


def _gcn_fused_kernel(x_ref, w1_ref, b1_ref, w2_ref, b2_ref, adj_hbm,
                      o_ref, adj_vmem, adj_sem):
    """out = adj @ (relu(adj @ (x @ W1) + b1) @ W2) + b2, fully fused in VMEM.

    adj (the largest operand) stays in HBM (memory_space=ANY); its DMA into a
    VMEM scratch is started immediately and overlapped with the layer-1
    feature projection x @ W1.
    """
    cd = x_ref.dtype

    adj_copy = pltpu.make_async_copy(adj_hbm, adj_vmem, adj_sem)
    adj_copy.start()

    # Layer-1 feature projection runs while the adj DMA is in flight.
    s1 = jnp.dot(x_ref[...], w1_ref[...],
                 preferred_element_type=jnp.float32).astype(cd)

    adj_copy.wait()
    adj = adj_vmem[...].astype(cd)   # single in-VMEM cast, no extra HBM copy

    # Layer 1: h = relu(adj @ s1 + b1)   (f32 accumulate, fused downcast).
    h = jnp.maximum(
        jnp.dot(adj, s1, preferred_element_type=jnp.float32) + b1_ref[...],
        0.0,
    ).astype(cd)

    # Layer 2: out = adj @ (h @ W2) + b2   (h never leaves VMEM).
    s2 = jnp.dot(h, w2_ref[...], preferred_element_type=jnp.float32).astype(cd)
    out = jnp.dot(adj, s2, preferred_element_type=jnp.float32) + b2_ref[...]
    o_ref[...] = out.astype(o_ref.dtype)


def make_gcn_forward(params, *, compute_dtype=jnp.bfloat16):
    """Build a jitted two-layer GCN forward.

    params = (w1, b1, w2, b2); w1:[nfeat,nhid], b1:[nhid], w2:[nhid,nclass],
    b2:[nclass].  Weights/biases are padded + cast ONCE here (jit constants);
    the per-call hot path only pads x (one fused pad+cast) and adj (pad only,
    kept f32 — the bf16 cast happens in-kernel).
    On v5e (no bf16 VPU path / overhead-bound small graphs) pass
    compute_dtype=jnp.float32 to drop every convert pass.
    """
    w1, b1, w2, b2 = params
    nfeat, nhid = w1.shape
    nclass = w2.shape[1]
    cd = jnp.dtype(compute_dtype)
    isz = cd.itemsize

    f_p, h_p, c_p = _pad_dim(nfeat), _pad_dim(nhid), _pad_dim(nclass)

    w1_p = _pad2(w1, f_p, h_p, cd)
    w2_p = _pad2(w2, h_p, c_p, cd)
    b1_p = _pad2(b1.reshape(1, nhid), 1, h_p, jnp.float32)
    b2_p = _pad2(b2.reshape(1, nclass), 1, c_p, jnp.float32)
    w1_p, w2_p, b1_p, b2_p = jax.device_put((w1_p, w2_p, b1_p, b2_p))

    def forward(x, adj):
        n = x.shape[0]
        assert x.shape[1] == nfeat and adj.shape == (n, n)
        n_p = _pad_dim(n)

        # Per-call padding.  Zero-padded x rows/cols make the padded parts of
        # s1/h exactly relu(b1)-shaped junk only in pad ROWS, and zero adj pad
        # columns guarantee they never contaminate real output rows.
        x_p = _pad2(x, n_p, f_p, cd)
        adj_p = adj.astype(jnp.float32)
        if n_p != n:
            adj_p = jnp.pad(adj_p, ((0, n_p - n), (0, n_p - n)))

        # ---- generation-aware VMEM budget --------------------------------
        adj_scratch = n_p * n_p * 4            # f32 DMA landing buffer
        adj_cast = n_p * n_p * isz             # in-kernel compute-dtype copy
        resident = (n_p * f_p + f_p * h_p + h_p * c_p) * isz + (h_p + c_p) * 4
        out_bytes = n_p * c_p * isz
        inter = n_p * (h_p + c_p) * (4 + isz) * 2   # generous: f32 + cd temps
        vmem_estimate = adj_scratch + adj_cast + resident + out_bytes + inter

        try:
            vmem_capacity = int(pltpu.get_tpu_info().vmem_capacity_bytes)
        except Exception:
            vmem_capacity = 64 << 20           # assume smallest (v7x per-TC)
        budget = vmem_capacity * 3 // 4        # leave compiler headroom
        assert vmem_estimate <= budget, (
            f"padded GCN operands (~{vmem_estimate >> 20} MiB) exceed the "
            f"single-kernel VMEM budget (~{budget >> 20} MiB); a tiled "
            f"two-pass variant is required for this graph size")
        vmem_limit = int(min(budget, max(vmem_estimate + (8 << 20), 16 << 20)))

        # Cost estimate from REAL dims (padded flops would be ~64x overstated
        # for tiny graphs and skew XLA scheduling).
        flops = 2 * (n * nfeat * nhid + n * n * nhid
                     + n * nhid * nclass + n * n * nclass)
        hbm_bytes = (x_p.size * isz + n_p * n_p * 4
                     + (w1_p.size + w2_p.size) * isz
                     + (b1_p.size + b2_p.size) * 4 + out_bytes)
        cost = pl.CostEstimate(flops=flops, transcendentals=0,
                               bytes_accessed=hbm_bytes)

        out_p = pl.pallas_call(
            _gcn_fused_kernel,
            out_shape=jax.ShapeDtypeStruct((n_p, c_p), cd),
            in_specs=[pl.BlockSpec(memory_space=pltpu.MemorySpace.VMEM)] * 5
                     + [pl.BlockSpec(memory_space=pl.ANY)],
            out_specs=pl.BlockSpec(memory_space=pltpu.MemorySpace.VMEM),
            scratch_shapes=[pltpu.VMEM((n_p, n_p), jnp.float32),
                            pltpu.SemaphoreType.DMA],
            compiler_params=pltpu.CompilerParams(vmem_limit_bytes=vmem_limit),
            cost_estimate=cost,
        )(x_p, w1_p, b1_p, w2_p, b2_p, adj_p)

        # Slice off padding and upcast the bf16 writeback for downstream use.
        return out_p[:n, :nclass].astype(jnp.float32)

    return jax.jit(forward)


def init_params(key, nfeat, nhid, nclass):
    k1, k2, k3, k4 = jax.random.split(key, 4)
    # Uniform(-1/sqrt(fan_out), 1/sqrt(fan_out)) like classic GCN reset_parameters.
    s1 = 1.0 / jnp.sqrt(nhid)
    s2 = 1.0 / jnp.sqrt(nclass)
    w1 = jax.random.uniform(k1, (nfeat, nhid), jnp.float32, -s1, s1)
    b1 = jax.random.uniform(k2, (nhid,), jnp.float32, -s1, s1)
    w2 = jax.random.uniform(k3, (nhid, nclass), jnp.float32, -s2, s2)
    b2 = jax.random.uniform(k4, (nclass,), jnp.float32, -s2, s2)
    return w1, b1, w2, b2


def reference_forward(x, adj, params):
    w1, b1, w2, b2 = params
    h = jnp.maximum(adj @ (x @ w1) + b1.reshape(1, -1), 0.0)
    return adj @ (h @ w2) + b2.reshape(1, -1)


if __name__ == "__main__":
    # Small shapes: N=16 nodes, nfeat=32, nhid=32, nclass=8.
    N, nfeat, nhid, nclass = 16, 32, 32, 8

    key = jax.random.PRNGKey(0)
    kx, kadj, kp = jax.random.split(key, 3)

    x = jax.random.normal(kx, (N, nfeat), jnp.float32)

    # Symmetric, row-normalized adjacency with self-loops (typical GCN input).
    a = (jax.random.uniform(kadj, (N, N)) > 0.7).astype(jnp.float32)
    a = jnp.maximum(a, a.T) + jnp.eye(N, dtype=jnp.float32)
    adj = a / jnp.sum(a, axis=1, keepdims=True)

    params = init_params(kp, nfeat, nhid, nclass)
    # TODO(synk): GCN.__init__'s dropout is never applied in forward() -> omitted.

    gcn = make_gcn_forward(params)          # pads/casts the weights once
    out = jax.block_until_ready(gcn(x, adj))

    ref = reference_forward(x, adj, params)
    assert out.shape == (N, nclass)
    # bf16 MXU operands / bf16 writeback with f32 accumulation -> compare
    # against the pure f32 reference with a bf16-appropriate tolerance.
    assert jnp.allclose(out, ref, atol=5e-2, rtol=5e-2), float(
        jnp.max(jnp.abs(out - ref)))

    print("KERNEL_OK")
</pallas_src>

<mosaic_0001>
module attributes {stable_mosaic.version = 11 : i64} {
  func.func @_gcn_fused_kernel(%arg0: memref<128x128xbf16, #tpu.memory_space<vmem>>, %arg1: memref<128x128xbf16, #tpu.memory_space<vmem>>, %arg2: memref<1x128xf32, #tpu.memory_space<vmem>>, %arg3: memref<128x128xbf16, #tpu.memory_space<vmem>>, %arg4: memref<1x128xf32, #tpu.memory_space<vmem>>, %arg5: memref<128x128xf32, #tpu.memory_space<any>>, %arg6: memref<128x128xbf16, #tpu.memory_space<vmem>>, %arg7: memref<128x128xf32, #tpu.memory_space<vmem>>, %arg8: memref<!tpu.dma_semaphore, #tpu.memory_space<semaphore_mem>>) attributes {dimension_semantics = [], scalar_prefetch = 0 : i64, scratch_operands = 2 : i64, tpu.core_type = #tpu.core_type<tc>} {
    tpu.enqueue_dma source(%arg5 : memref<128x128xf32, #tpu.memory_space<any>>) target(%arg7 : memref<128x128xf32, #tpu.memory_space<vmem>>) target_semaphore(%arg8 : memref<!tpu.dma_semaphore, #tpu.memory_space<semaphore_mem>>)
    %c0 = arith.constant 0 : index
    %c0_0 = arith.constant 0 : index
    %0 = vector.load %arg0[%c0, %c0_0] : memref<128x128xbf16, #tpu.memory_space<vmem>>, vector<128x128xbf16>
    %c0_1 = arith.constant 0 : index
    %c0_2 = arith.constant 0 : index
    %1 = vector.load %arg1[%c0_1, %c0_2] : memref<128x128xbf16, #tpu.memory_space<vmem>>, vector<128x128xbf16>
    %cst = arith.constant dense<0.000000e+00> : vector<128x128xf32>
    %2 = tpu.matmul %0, %1, %cst {dimension_numbers = #tpu.dot_dimension_numbers<[1], [0], [0], [1], [0, 0, 1, 1], [], []>} : vector<128x128xbf16>, vector<128x128xbf16>, vector<128x128xf32> -> vector<128x128xf32>
    %3 = arith.truncf %2 : vector<128x128xf32> to vector<128x128xbf16>
    tpu.wait_dma2 semaphore(%arg8 : memref<!tpu.dma_semaphore, #tpu.memory_space<semaphore_mem>>) src(%arg5 : memref<128x128xf32, #tpu.memory_space<any>>) dst(%arg7 : memref<128x128xf32, #tpu.memory_space<vmem>>)
    %c0_3 = arith.constant 0 : index
    %c0_4 = arith.constant 0 : index
    %4 = vector.load %arg7[%c0_3, %c0_4] : memref<128x128xf32, #tpu.memory_space<vmem>>, vector<128x128xf32>
    %5 = arith.truncf %4 : vector<128x128xf32> to vector<128x128xbf16>
    %cst_5 = arith.constant dense<0.000000e+00> : vector<128x128xf32>
    %6 = tpu.matmul %5, %3, %cst_5 {dimension_numbers = #tpu.dot_dimension_numbers<[1], [0], [0], [1], [0, 0, 1, 1], [], []>} : vector<128x128xbf16>, vector<128x128xbf16>, vector<128x128xf32> -> vector<128x128xf32>
    %c0_6 = arith.constant 0 : index
    %c0_7 = arith.constant 0 : index
    %7 = vector.load %arg2[%c0_6, %c0_7] : memref<1x128xf32, #tpu.memory_space<vmem>>, vector<1x128xf32>
    %8 = vector.broadcast %7 : vector<1x128xf32> to vector<128x128xf32>
    %9 = arith.addf %6, %8 : vector<128x128xf32>
    %cst_8 = arith.constant 0.000000e+00 : f32
    %10 = vector.broadcast %cst_8 : f32 to vector<128x128xf32>
    %11 = arith.maximumf %9, %10 : vector<128x128xf32>
    %12 = arith.truncf %11 : vector<128x128xf32> to vector<128x128xbf16>
    %c0_9 = arith.constant 0 : index
    %c0_10 = arith.constant 0 : index
    %13 = vector.load %arg3[%c0_9, %c0_10] : memref<128x128xbf16, #tpu.memory_space<vmem>>, vector<128x128xbf16>
    %cst_11 = arith.constant dense<0.000000e+00> : vector<128x128xf32>
    %14 = tpu.matmul %12, %13, %cst_11 {dimension_numbers = #tpu.dot_dimension_numbers<[1], [0], [0], [1], [0, 0, 1, 1], [], []>} : vector<128x128xbf16>, vector<128x128xbf16>, vector<128x128xf32> -> vector<128x128xf32>
    %15 = arith.truncf %14 : vector<128x128xf32> to vector<128x128xbf16>
    %cst_12 = arith.constant dense<0.000000e+00> : vector<128x128xf32>
    %16 = tpu.matmul %5, %15, %cst_12 {dimension_numbers = #tpu.dot_dimension_numbers<[1], [0], [0], [1], [0, 0, 1, 1], [], []>} : vector<128x128xbf16>, vector<128x128xbf16>, vector<128x128xf32> -> vector<128x128xf32>
    %c0_13 = arith.constant 0 : index
    %c0_14 = arith.constant 0 : index
    %17 = vector.load %arg4[%c0_13, %c0_14] : memref<1x128xf32, #tpu.memory_space<vmem>>, vector<1x128xf32>
    %18 = vector.broadcast %17 : vector<1x128xf32> to vector<128x128xf32>
    %19 = arith.addf %16, %18 : vector<128x128xf32>
    %20 = arith.truncf %19 : vector<128x128xf32> to vector<128x128xbf16>
    %c0_15 = arith.constant 0 : index
    %c0_16 = arith.constant 0 : index
    %21 = vector.load %arg6[%c0_15, %c0_16] : memref<128x128xbf16, #tpu.memory_space<vmem>>, vector<128x128xbf16>
    tpu.vector_store %arg6[%c0_15, %c0_16], %20 {strides = array<i32>} : memref<128x128xbf16, #tpu.memory_space<vmem>>, vector<128x128xbf16>,
    return
  }
}

</mosaic_0001>

<llo_original>
// kernel: forward.1
$region0: #{forward.1}
  #allocation0 [shape = 'u32[]', space=smem, size = 0x4, offset = 0x4, fixed_abs, tag = 'smem constant byte address 0x4 - core index']
  #allocation1 [shape = 'u32[72,128]{1,0:T(1,128)}', space=vmem, size = 0x9000, scoped, tag = 'internal scratch']
  #allocation2 [shape = 'f32[128,128]{1,0:T(8,128)}', space=vmem, size = 0x10000, scoped, tag = 'scratch operand']
  #allocation3 [shape = 's32[1]{0}', space=sflag, size = 0x4, scoped, tag = 'scratch operand']
  #allocation4 [shape = 's32[]', space=sflag, size = 0x4, offset = 0, fixed_abs, tag = 'sflag constant byte address 0x0 - dummy sync flag']
  %s0 = inlined_call_operand.vmem [shape: bf16[128,128], index: 0, kind: input, shape index: {}]
  %s1 = inlined_call_operand.vmem [shape: bf16[128,128], index: 1, kind: input, shape index: {}]
  %s2 = inlined_call_operand.vmem [shape: f32[1,128], index: 2, kind: input, shape index: {}]
  %s3 = inlined_call_operand.vmem [shape: bf16[128,128], index: 3, kind: input, shape index: {}]
  %s4 = inlined_call_operand.vmem [shape: f32[1,128], index: 4, kind: input, shape index: {}]
  %s5 = inlined_call_operand.vmem [shape: f32[128,128], index: 5, kind: input, shape index: {}]
  %s6 = inlined_call_operand.vmem [shape: bf16[128,128], index: 6, kind: output, shape index: {}]
  %s7 = sld [smem:[#allocation0]]
  $region49: #{forward.1} parent=0
    _
  %s9 = ssub.s32 1, %s7
  %s10 = scalar_select 0, %s9, %s7
  // Predicated region
  $region2: #{forward.1} parent=0 // pred_check
    _
  $region3: #{forward.1} parent=0 // pred_check_branch
    %12 = sbr.rel (0) target = $region5
  $region4: #{forward.1} parent=0 // pred_region
    _
  $region5: #{forward.1} parent=0 // pred_fallthru
    _
  // Predicated region
  $region6: #{forward.1} parent=0 // pred_check
    _
  $region7: #{forward.1} parent=0 // pred_check_branch
    %14 = sbr.rel (0) target = $region9
  $region8: #{forward.1} parent=0 // pred_region
    _
  $region9: #{forward.1} parent=0 // pred_fallthru
    _
  // Predicated region
  $region10: #{forward.1} parent=0 // pred_check
    _
  $region11: #{forward.1} parent=0 // pred_check_branch
    %16 = sbr.rel (0) target = $region13
  $region12: #{forward.1} parent=0 // pred_region
    _
  $region13: #{forward.1} parent=0 // pred_fallthru
    _
  // Predicated region
  $region14: #{forward.1} parent=0 // pred_check
    _
  $region15: #{forward.1} parent=0 // pred_check_branch
    %18 = sbr.rel (0) target = $region17
  $region16: #{forward.1} parent=0 // pred_region
    _
  $region17: #{forward.1} parent=0 // pred_fallthru
    _
  // Predicated region
  $region18: #{forward.1} parent=0 // pred_check
    _
  $region19: #{forward.1} parent=0 // pred_check_branch
    %20 = sbr.rel (0) target = $region21
  $region20: #{forward.1} parent=0 // pred_region
    _
  $region21: #{forward.1} parent=0 // pred_fallthru
    _
  // Predicated region
  $region22: #{forward.1} parent=0 // pred_check
    _
  $region23: #{forward.1} parent=0 // pred_check_branch
    %22 = sbr.rel (0) target = $region25
  $region24: #{forward.1} parent=0 // pred_region
    loop: start=0, step=1, limit=1
    $region26: #{forward.1} parent=24 // loop_pre_header
      _
    $region27: #{forward.1} parent=24 // loop_header
      %s24 = sphi 0, %s28
      %p25 = scmp.ge.s32.totalorder %s24, 1
      %s29 = sphi %s5, %s5
      %s30 = sphi [#allocation2], [#allocation2]
    $region28: #{forward.1} parent=24 // loop_header_branch
      %27 = sbr.rel (%p25) target = $region32
    $region29: #{forward.1} parent=24 // loop_body
      %v31 = vld [vmem:[%s29] sm:$0xff]
      %32 = vst [vmem:[%s30] sm:$0xff] %v31
      %v33 = vld [vmem:[%s29 + $0x8] sm:$0xff]
      %34 = vst [vmem:[%s30 + $0x8] sm:$0xff] %v33
      %v35 = vld [vmem:[%s29 + $0x10] sm:$0xff]
      %36 = vst [vmem:[%s30 + $0x10] sm:$0xff] %v35
      %v37 = vld [vmem:[%s29 + $0x18] sm:$0xff]
      %38 = vst [vmem:[%s30 + $0x18] sm:$0xff] %v37
      %v39 = vld [vmem:[%s29 + $0x20] sm:$0xff]
      %40 = vst [vmem:[%s30 + $0x20] sm:$0xff] %v39
      %v41 = vld [vmem:[%s29 + $0x28] sm:$0xff]
      %42 = vst [vmem:[%s30 + $0x28] sm:$0xff] %v41
      %v43 = vld [vmem:[%s29 + $0x30] sm:$0xff]
      %44 = vst [vmem:[%s30 + $0x30] sm:$0xff] %v43
      %v45 = vld [vmem:[%s29 + $0x38] sm:$0xff]
      %46 = vst [vmem:[%s30 + $0x38] sm:$0xff] %v45
      %v47 = vld [vmem:[%s29 + $0x40] sm:$0xff]
      %48 = vst [vmem:[%s30 + $0x40] sm:$0xff] %v47
      %v49 = vld [vmem:[%s29 + $0x48] sm:$0xff]
      %50 = vst [vmem:[%s30 + $0x48] sm:$0xff] %v49
      %v51 = vld [vmem:[%s29 + $0x50] sm:$0xff]
      %52 = vst [vmem:[%s30 + $0x50] sm:$0xff] %v51
      %v53 = vld [vmem:[%s29 + $0x58] sm:$0xff]
      %54 = vst [vmem:[%s30 + $0x58] sm:$0xff] %v53
      %v55 = vld [vmem:[%s29 + $0x60] sm:$0xff]
      %56 = vst [vmem:[%s30 + $0x60] sm:$0xff] %v55
      %v57 = vld [vmem:[%s29 + $0x68] sm:$0xff]
      %58 = vst [vmem:[%s30 + $0x68] sm:$0xff] %v57
      %v59 = vld [vmem:[%s29 + $0x70] sm:$0xff]
      %60 = vst [vmem:[%s30 + $0x70] sm:$0xff] %v59
      %v61 = vld [vmem:[%s29 + $0x78] sm:$0xff]
      %62 = vst [vmem:[%s30 + $0x78] sm:$0xff] %v61
    $region30: #{forward.1} parent=24 // loop_footer
      %s28 = sadd.s32 1, %s24
    $region31: #{forward.1} parent=24 // loop_footer_branch
      %23 = sbr.rel target = $region27
    $region32: #{forward.1} parent=24 // loop_exit
      _
  $region25: #{forward.1} parent=0 // pred_fallthru
    _
  // Predicated region
  $region33: #{forward.1} parent=0 // pred_check
    _
  $region34: #{forward.1} parent=0 // pred_check_branch
    %64 = sbr.rel target = $region36
  $region35: #{forward.1} parent=0 // pred_region
    _
  $region36: #{forward.1} parent=0 // pred_fallthru
    _
  // Predicated region
  $region37: #{forward.1} parent=0 // pred_check
    _
  $region38: #{forward.1} parent=0 // pred_check_branch
    %67 = sbr.rel (0) target = $region40
  $region39: #{forward.1} parent=0 // pred_region
    %68 = vsyncadd [#allocation3], 2048
  $region40: #{forward.1} parent=0 // pred_fallthru
    _
  %v69 = vld [vmem:[%s0] sm:$0xf]
  %v70 = vld [vmem:[%s0 + $0x4] sm:$0xf]
  %v71 = vld [vmem:[%s0 + $0x8] sm:$0xf]
  %v72 = vld [vmem:[%s0 + $0xc] sm:$0xf]
  %v73 = vld [vmem:[%s0 + $0x10] sm:$0xf]
  %v74 = vld [vmem:[%s0 + $0x14] sm:$0xf]
  %v75 = vld [vmem:[%s0 + $0x18] sm:$0xf]
  %v76 = vld [vmem:[%s0 + $0x1c] sm:$0xf]
  %v77 = vld [vmem:[%s0 + $0x20] sm:$0xf]
  %v78 = vld [vmem:[%s0 + $0x24] sm:$0xf]
  %v79 = vld [vmem:[%s0 + $0x28] sm:$0xf]
  %v80 = vld [vmem:[%s0 + $0x2c] sm:$0xf]
  %v81 = vld [vmem:[%s0 + $0x30] sm:$0xf]
  %v82 = vld [vmem:[%s0 + $0x34] sm:$0xf]
  %v83 = vld [vmem:[%s0 + $0x38] sm:$0xf]
  %v84 = vld [vmem:[%s0 + $0x3c] sm:$0xf]
  %v85 = vld [vmem:[%s1] sm:$0xf]
  %v86 = vld [vmem:[%s1 + $0x4] sm:$0xf]
  %v87 = vld [vmem:[%s1 + $0x8] sm:$0xf]
  %v88 = vld [vmem:[%s1 + $0xc] sm:$0xf]
  %v89 = vld [vmem:[%s1 + $0x10] sm:$0xf]
  %v90 = vld [vmem:[%s1 + $0x14] sm:$0xf]
  %v91 = vld [vmem:[%s1 + $0x18] sm:$0xf]
  %v92 = vld [vmem:[%s1 + $0x1c] sm:$0xf]
  %v93 = vld [vmem:[%s1 + $0x20] sm:$0xf]
  %v94 = vld [vmem:[%s1 + $0x24] sm:$0xf]
  %v95 = vld [vmem:[%s1 + $0x28] sm:$0xf]
  %v96 = vld [vmem:[%s1 + $0x2c] sm:$0xf]
  %v97 = vld [vmem:[%s1 + $0x30] sm:$0xf]
  %v98 = vld [vmem:[%s1 + $0x34] sm:$0xf]
  %v99 = vld [vmem:[%s1 + $0x38] sm:$0xf]
  %v100 = vld [vmem:[%s1 + $0x3c] sm:$0xf]
  %v117 = vunpack.c.l.b16 %v69
  %v118 = vunpack.c.l.b16 %v70
  %v119 = vunpack.c.l.b16 %v71
  %v120 = vunpack.c.l.b16 %v72
  %v121 = vunpack.c.l.b16 %v73
  %v122 = vunpack.c.l.b16 %v74
  %v123 = vunpack.c.l.b16 %v75
  %v124 = vunpack.c.l.b16 %v76
  %v125 = vunpack.c.l.b16 %v77
  %v126 = vunpack.c.l.b16 %v78
  %v127 = vunpack.c.l.b16 %v79
  %v128 = vunpack.c.l.b16 %v80
  %v129 = vunpack.c.l.b16 %v81
  %v130 = vunpack.c.l.b16 %v82
  %v131 = vunpack.c.l.b16 %v83
  %v132 = vunpack.c.l.b16 %v84
  %v133 = vpack.c.b16 %v118, %v117
  %v134 = vpack.c.b16 %v120, %v119
  %v135 = vpack.c.b16 %v122, %v121
  %v136 = vpack.c.b16 %v124, %v123
  %v137 = vpack.c.b16 %v126, %v125
  %v138 = vpack.c.b16 %v128, %v127
  %v139 = vpack.c.b16 %v130, %v129
  %v140 = vpack.c.b16 %v132, %v131
  %v165 = vunpack.c.l.b16 %v85
  %v166 = vunpack.c.l.b16 %v86
  %v167 = vunpack.c.l.b16 %v87
  %v168 = vunpack.c.l.b16 %v88
  %v169 = vunpack.c.l.b16 %v89
  %v170 = vunpack.c.l.b16 %v90
  %v171 = vunpack.c.l.b16 %v91
  %v172 = vunpack.c.l.b16 %v92
  %v173 = vunpack.c.l.b16 %v93
  %v174 = vunpack.c.l.b16 %v94
  %v175 = vunpack.c.l.b16 %v95
  %v176 = vunpack.c.l.b16 %v96
  %v177 = vunpack.c.l.b16 %v97
  %v178 = vunpack.c.l.b16 %v98
  %v179 = vunpack.c.l.b16 %v99
  %v180 = vunpack.c.l.b16 %v100
  %v181 = vpack.c.b16 %v166, %v165
  %v182 = vpack.c.b16 %v168, %v167
  %v183 = vpack.c.b16 %v170, %v169
  %v184 = vpack.c.b16 %v172, %v171
  %v185 = vpack.c.b16 %v174, %v173
  %v186 = vpack.c.b16 %v176, %v175
  %v187 = vpack.c.b16 %v178, %v177
  %v188 = vpack.c.b16 %v180, %v179
  %197 = vmatpush.bf16.msra.mxu0 %v188
  %198 = vmatpush.bf16.msra.mxu0 %v187
  %199 = vmatpush.bf16.msra.mxu0 %v186
  %200 = vmatpush.bf16.msra.mxu0 %v185
  %201 = vmatpush.bf16.msra.mxu0 %v184
  %202 = vmatpush.bf16.msra.mxu0 %v183
  %203 = vmatpush.bf16.msra.mxu0 %v182
  %204 = vmatpush.bf16.msra.mxu0 %v181
  %205 = vmatmul.bf16.gmra.mxu0 %v133
  %v206 = vpop.f32.mrf.mxu0
  %v207 = vadd.f32 0.0, %v206
  %v208 = vpop.f32.mrf.mxu0
  %v209 = vadd.f32 0.0, %v208
  %210 = vmatmul.bf16.gmra.mxu0 %v134
  %v211 = vpop.f32.mrf.mxu0
  %v212 = vadd.f32 0.0, %v211
  %v213 = vpop.f32.mrf.mxu0
  %v214 = vadd.f32 0.0, %v213
  %215 = vmatmul.bf16.gmra.mxu0 %v135
  %v216 = vpop.f32.mrf.mxu0
  %v217 = vadd.f32 0.0, %v216
  %v218 = vpop.f32.mrf.mxu0
  %v219 = vadd.f32 0.0, %v218
  %220 = vmatmul.bf16.gmra.mxu0 %v136
  %v221 = vpop.f32.mrf.mxu0
  %v222 = vadd.f32 0.0, %v221
  %v223 = vpop.f32.mrf.mxu0
  %v224 = vadd.f32 0.0, %v223
  %225 = vmatmul.bf16.gmra.mxu0 %v137
  %v226 = vpop.f32.mrf.mxu0
  %v227 = vadd.f32 0.0, %v226
  %v228 = vpop.f32.mrf.mxu0
  %v229 = vadd.f32 0.0, %v228
  %230 = vmatmul.bf16.gmra.mxu0 %v138
  %v231 = vpop.f32.mrf.mxu0
  %v232 = vadd.f32 0.0, %v231
  %v233 = vpop.f32.mrf.mxu0
  %v234 = vadd.f32 0.0, %v233
  %235 = vmatmul.bf16.gmra.mxu0 %v139
  %v236 = vpop.f32.mrf.mxu0
  %v237 = vadd.f32 0.0, %v236
  %v238 = vpop.f32.mrf.mxu0
  %v239 = vadd.f32 0.0, %v238
  %240 = vmatmul.bf16.gmra.mxu0 %v140
  %v241 = vpop.f32.mrf.mxu0
  %v242 = vadd.f32 0.0, %v241
  %v243 = vpop.f32.mrf.mxu0
  %v244 = vadd.f32 0.0, %v243
  %245 = vdwg.mxu0
  %v246 = vpack.c.bf16 %v209, %v207
  %v247 = vpack.c.bf16 %v214, %v212
  %v248 = vpack.c.bf16 %v219, %v217
  %v249 = vpack.c.bf16 %v224, %v222
  %v250 = vpack.c.bf16 %v229, %v227
  %v251 = vpack.c.bf16 %v234, %v232
  %v252 = vpack.c.bf16 %v239, %v237
  %v253 = vpack.c.bf16 %v244, %v242
  %s254 = smul.u32 128, 1
  %s255 = sshll.u32 %s254, 4
  %256 = dma.done [#allocation3], %s255
  %v257 = vld [vmem:[#allocation2] sm:$0xff]
  %v258 = vld [vmem:[#allocation2 + $0x8] sm:$0xff]
  %v259 = vld [vmem:[#allocation2 + $0x10] sm:$0xff]
  %v260 = vld [vmem:[#allocation2 + $0x18] sm:$0xff]
  %v261 = vld [vmem:[#allocation2 + $0x20] sm:$0xff]
  %v262 = vld [vmem:[#allocation2 + $0x28] sm:$0xff]
  %v263 = vld [vmem:[#allocation2 + $0x30] sm:$0xff]
  %v264 = vld [vmem:[#allocation2 + $0x38] sm:$0xff]
  %v265 = vld [vmem:[#allocation2 + $0x40] sm:$0xff]
  %v266 = vld [vmem:[#allocation2 + $0x48] sm:$0xff]
  %v267 = vld [vmem:[#allocation2 + $0x50] sm:$0xff]
  %v268 = vld [vmem:[#allocation2 + $0x58] sm:$0xff]
  %v269 = vld [vmem:[#allocation2 + $0x60] sm:$0xff]
  %v270 = vld [vmem:[#allocation2 + $0x68] sm:$0xff]
  %v271 = vld [vmem:[#allocation2 + $0x70] sm:$0xff]
  %v272 = vld [vmem:[#allocation2 + $0x78] sm:$0xff]
  %v273 = vpack.c.bf16 %v258, %v257
  %v274 = vpack.c.bf16 %v260, %v259
  %v275 = vpack.c.bf16 %v262, %v261
  %v276 = vpack.c.bf16 %v264, %v263
  %v277 = vpack.c.bf16 %v266, %v265
  %v278 = vpack.c.bf16 %v268, %v267
  %v279 = vpack.c.bf16 %v270, %v269
  %v280 = vpack.c.bf16 %v272, %v271
  %v281 = vld [vmem:[%s2] sm:$0x1]
  %v283 = vperm.slane %v281, 0
  %285 = vmatpush.bf16.msra.mxu0 %v253
  %286 = vmatpush.bf16.msra.mxu0 %v252
  %287 = vmatpush.bf16.msra.mxu0 %v251
  %288 = vmatpush.bf16.msra.mxu0 %v250
  %289 = vmatpush.bf16.msra.mxu0 %v249
  %290 = vmatpush.bf16.msra.mxu0 %v248
  %291 = vmatpush.bf16.msra.mxu0 %v247
  %292 = vmatpush.bf16.msra.mxu0 %v246
  %293 = vmatmul.bf16.gmra.mxu0 %v273
  %v294 = vpop.f32.mrf.mxu0
  %v295 = vadd.f32 %v283, %v294
  %v296 = vpop.f32.mrf.mxu0
  %v297 = vadd.f32 %v283, %v296
  %298 = vmatmul.bf16.gmra.mxu0 %v274
  %v299 = vpop.f32.mrf.mxu0
  %v300 = vadd.f32 %v283, %v299
  %v301 = vpop.f32.mrf.mxu0
  %v302 = vadd.f32 %v283, %v301
  %303 = vmatmul.bf16.gmra.mxu0 %v275
  %v304 = vpop.f32.mrf.mxu0
  %v305 = vadd.f32 %v283, %v304
  %v306 = vpop.f32.mrf.mxu0
  %v307 = vadd.f32 %v283, %v306
  %308 = vmatmul.bf16.gmra.mxu0 %v276
  %v309 = vpop.f32.mrf.mxu0
  %v310 = vadd.f32 %v283, %v309
  %v311 = vpop.f32.mrf.mxu0
  %v312 = vadd.f32 %v283, %v311
  %313 = vmatmul.bf16.gmra.mxu0 %v277
  %v314 = vpop.f32.mrf.mxu0
  %v315 = vadd.f32 %v283, %v314
  %v316 = vpop.f32.mrf.mxu0
  %v317 = vadd.f32 %v283, %v316
  %318 = vmatmul.bf16.gmra.mxu0 %v278
  %v319 = vpop.f32.mrf.mxu0
  %v320 = vadd.f32 %v283, %v319
  %v321 = vpop.f32.mrf.mxu0
  %v322 = vadd.f32 %v283, %v321
  %323 = vmatmul.bf16.gmra.mxu0 %v279
  %v324 = vpop.f32.mrf.mxu0
  %v325 = vadd.f32 %v283, %v324
  %v326 = vpop.f32.mrf.mxu0
  %v327 = vadd.f32 %v283, %v326
  %328 = vmatmul.bf16.gmra.mxu0 %v280
  %v329 = vpop.f32.mrf.mxu0
  %v330 = vadd.f32 %v283, %v329
  %v331 = vpop.f32.mrf.mxu0
  %v332 = vadd.f32 %v283, %v331
  %333 = vdwg.mxu0
  %v334 = vmax.f32 %v295, 0.0
  %v335 = vmax.f32 %v297, 0.0
  %v336 = vmax.f32 %v300, 0.0
  %v337 = vmax.f32 %v302, 0.0
  %v338 = vmax.f32 %v305, 0.0
  %v339 = vmax.f32 %v307, 0.0
  %v340 = vmax.f32 %v310, 0.0
  %v341 = vmax.f32 %v312, 0.0
  %v342 = vmax.f32 %v315, 0.0
  %v343 = vmax.f32 %v317, 0.0
  %v344 = vmax.f32 %v320, 0.0
  %v345 = vmax.f32 %v322, 0.0
  %v346 = vmax.f32 %v325, 0.0
  %v347 = vmax.f32 %v327, 0.0
  %v348 = vmax.f32 %v330, 0.0
  %v349 = vmax.f32 %v332, 0.0
  %v350 = vpack.c.bf16 %v335, %v334
  %v351 = vpack.c.bf16 %v337, %v336
  %v352 = vpack.c.bf16 %v339, %v338
  %v353 = vpack.c.bf16 %v341, %v340
  %v354 = vpack.c.bf16 %v343, %v342
  %v355 = vpack.c.bf16 %v345, %v344
  %v356 = vpack.c.bf16 %v347, %v346
  %v357 = vpack.c.bf16 %v349, %v348
  %v358 = vld [vmem:[%s3] sm:$0xf]
  %v359 = vld [vmem:[%s3 + $0x4] sm:$0xf]
  %v360 = vld [vmem:[%s3 + $0x8] sm:$0xf]
  %v361 = vld [vmem:[%s3 + $0xc] sm:$0xf]
  %v362 = vld [vmem:[%s3 + $0x10] sm:$0xf]
  %v363 = vld [vmem:[%s3 + $0x14] sm:$0xf]
  %v364 = vld [vmem:[%s3 + $0x18] sm:$0xf]
  %v365 = vld [vmem:[%s3 + $0x1c] sm:$0xf]
  %v366 = vld [vmem:[%s3 + $0x20] sm:$0xf]
  %v367 = vld [vmem:[%s3 + $0x24] sm:$0xf]
  %v368 = vld [vmem:[%s3 + $0x28] sm:$0xf]
  %v369 = vld [vmem:[%s3 + $0x2c] sm:$0xf]
  %v370 = vld [vmem:[%s3 + $0x30] sm:$0xf]
  %v371 = vld [vmem:[%s3 + $0x34] sm:$0xf]
  %v372 = vld [vmem:[%s3 + $0x38] sm:$0xf]
  %v373 = vld [vmem:[%s3 + $0x3c] sm:$0xf]
  %v390 = vunpack.c.l.b16 %v358
  %v391 = vunpack.c.l.b16 %v359
  %v392 = vunpack.c.l.b16 %v360
  %v393 = vunpack.c.l.b16 %v361
  %v394 = vunpack.c.l.b16 %v362
  %v395 = vunpack.c.l.b16 %v363
  %v396 = vunpack.c.l.b16 %v364
  %v397 = vunpack.c.l.b16 %v365
  %v398 = vunpack.c.l.b16 %v366
  %v399 = vunpack.c.l.b16 %v367
  %v400 = vunpack.c.l.b16 %v368
  %v401 = vunpack.c.l.b16 %v369
  %v402 = vunpack.c.l.b16 %v370
  %v403 = vunpack.c.l.b16 %v371
  %v404 = vunpack.c.l.b16 %v372
  %v405 = vunpack.c.l.b16 %v373
  %v406 = vpack.c.b16 %v391, %v390
  %v407 = vpack.c.b16 %v393, %v392
  %v408 = vpack.c.b16 %v395, %v394
  %v409 = vpack.c.b16 %v397, %v396
  %v410 = vpack.c.b16 %v399, %v398
  %v411 = vpack.c.b16 %v401, %v400
  %v412 = vpack.c.b16 %v403, %v402
  %v413 = vpack.c.b16 %v405, %v404
  %422 = vmatpush.bf16.msra.mxu0 %v413
  %423 = vmatpush.bf16.msra.mxu0 %v412
  %424 = vmatpush.bf16.msra.mxu0 %v411
  %425 = vmatpush.bf16.msra.mxu0 %v410
  %426 = vmatpush.bf16.msra.mxu0 %v409
  %427 = vmatpush.bf16.msra.mxu0 %v408
  %428 = vmatpush.bf16.msra.mxu0 %v407
  %429 = vmatpush.bf16.msra.mxu0 %v406
  %430 = vmatmul.bf16.gmra.mxu0 %v350
  %v431 = vpop.f32.mrf.mxu0
  %v432 = vadd.f32 0.0, %v431
  %v433 = vpop.f32.mrf.mxu0
  %v434 = vadd.f32 0.0, %v433
  %435 = vmatmul.bf16.gmra.mxu0 %v351
  %v436 = vpop.f32.mrf.mxu0
  %v437 = vadd.f32 0.0, %v436
  %v438 = vpop.f32.mrf.mxu0
  %v439 = vadd.f32 0.0, %v438
  %440 = vmatmul.bf16.gmra.mxu0 %v352
  %v441 = vpop.f32.mrf.mxu0
  %v442 = vadd.f32 0.0, %v441
  %v443 = vpop.f32.mrf.mxu0
  %v444 = vadd.f32 0.0, %v443
  %445 = vmatmul.bf16.gmra.mxu0 %v353
  %v446 = vpop.f32.mrf.mxu0
  %v447 = vadd.f32 0.0, %v446
  %v448 = vpop.f32.mrf.mxu0
  %v449 = vadd.f32 0.0, %v448
  %450 = vmatmul.bf16.gmra.mxu0 %v354
  %v451 = vpop.f32.mrf.mxu0
  %v452 = vadd.f32 0.0, %v451
  %v453 = vpop.f32.mrf.mxu0
  %v454 = vadd.f32 0.0, %v453
  %455 = vmatmul.bf16.gmra.mxu0 %v355
  %v456 = vpop.f32.mrf.mxu0
  %v457 = vadd.f32 0.0, %v456
  %v458 = vpop.f32.mrf.mxu0
  %v459 = vadd.f32 0.0, %v458
  %460 = vmatmul.bf16.gmra.mxu0 %v356
  %v461 = vpop.f32.mrf.mxu0
  %v462 = vadd.f32 0.0, %v461
  %v463 = vpop.f32.mrf.mxu0
  %v464 = vadd.f32 0.0, %v463
  %465 = vmatmul.bf16.gmra.mxu0 %v357
  %v466 = vpop.f32.mrf.mxu0
  %v467 = vadd.f32 0.0, %v466
  %v468 = vpop.f32.mrf.mxu0
  %v469 = vadd.f32 0.0, %v468
  %470 = vdwg.mxu0
  %v471 = vpack.c.bf16 %v434, %v432
  %v472 = vpack.c.bf16 %v439, %v437
  %v473 = vpack.c.bf16 %v444, %v442
  %v474 = vpack.c.bf16 %v449, %v447
  %v475 = vpack.c.bf16 %v454, %v452
  %v476 = vpack.c.bf16 %v459, %v457
  %v477 = vpack.c.bf16 %v464, %v462
  %v478 = vpack.c.bf16 %v469, %v467
  %v479 = vld [vmem:[%s4] sm:$0x1]
  %v481 = vperm.slane %v479, 0
  %483 = vmatpush.bf16.msra.mxu0 %v478
  %484 = vmatpush.bf16.msra.mxu0 %v477
  %485 = vmatpush.bf16.msra.mxu0 %v476
  %486 = vmatpush.bf16.msra.mxu0 %v475
  %487 = vmatpush.bf16.msra.mxu0 %v474
  %488 = vmatpush.bf16.msra.mxu0 %v473
  %489 = vmatpush.bf16.msra.mxu0 %v472
  %490 = vmatpush.bf16.msra.mxu0 %v471
  %491 = vmatmul.bf16.gmra.mxu0 %v273
  %v492 = vpop.f32.mrf.mxu0
  %v493 = vadd.f32 %v481, %v492
  %v494 = vpop.f32.mrf.mxu0
  %v495 = vadd.f32 %v481, %v494
  %496 = vmatmul.bf16.gmra.mxu0 %v274
  %v497 = vpop.f32.mrf.mxu0
  %v498 = vadd.f32 %v481, %v497
  %v499 = vpop.f32.mrf.mxu0
  %v500 = vadd.f32 %v481, %v499
  %501 = vmatmul.bf16.gmra.mxu0 %v275
  %v502 = vpop.f32.mrf.mxu0
  %v503 = vadd.f32 %v481, %v502
  %v504 = vpop.f32.mrf.mxu0
  %v505 = vadd.f32 %v481, %v504
  %506 = vmatmul.bf16.gmra.mxu0 %v276
  %v507 = vpop.f32.mrf.mxu0
  %v508 = vadd.f32 %v481, %v507
  %v509 = vpop.f32.mrf.mxu0
  %v510 = vadd.f32 %v481, %v509
  %511 = vmatmul.bf16.gmra.mxu0 %v277
  %v512 = vpop.f32.mrf.mxu0
  %v513 = vadd.f32 %v481, %v512
  %v514 = vpop.f32.mrf.mxu0
  %v515 = vadd.f32 %v481, %v514
  %516 = vmatmul.bf16.gmra.mxu0 %v278
  %v517 = vpop.f32.mrf.mxu0
  %v518 = vadd.f32 %v481, %v517
  %v519 = vpop.f32.mrf.mxu0
  %v520 = vadd.f32 %v481, %v519
  %521 = vmatmul.bf16.gmra.mxu0 %v279
  %v522 = vpop.f32.mrf.mxu0
  %v523 = vadd.f32 %v481, %v522
  %v524 = vpop.f32.mrf.mxu0
  %v525 = vadd.f32 %v481, %v524
  %526 = vmatmul.bf16.gmra.mxu0 %v280
  %v527 = vpop.f32.mrf.mxu0
  %v528 = vadd.f32 %v481, %v527
  %v529 = vpop.f32.mrf.mxu0
  %v530 = vadd.f32 %v481, %v529
  %531 = vdwg.mxu0
  %v532 = vpack.c.bf16 %v493, %v493
  %v533 = vpack.c.bf16 %v495, %v495
  %v534 = vpack.c.bf16 %v498, %v498
  %v535 = vpack.c.bf16 %v500, %v500
  %v536 = vpack.c.bf16 %v503, %v503
  %v537 = vpack.c.bf16 %v505, %v505
  %v538 = vpack.c.bf16 %v508, %v508
  %v539 = vpack.c.bf16 %v510, %v510
  %v540 = vpack.c.bf16 %v513, %v513
  %v541 = vpack.c.bf16 %v515, %v515
  %v542 = vpack.c.bf16 %v518, %v518
  %v543 = vpack.c.bf16 %v520, %v520
  %v544 = vpack.c.bf16 %v523, %v523
  %v545 = vpack.c.bf16 %v525, %v525
  %v546 = vpack.c.bf16 %v528, %v528
  %v547 = vpack.c.bf16 %v530, %v530
  %548 = vst [vmem:[%s6] sm:$0xf] %v532
  %549 = vst [vmem:[%s6 + $0x4] sm:$0xf] %v533
  %550 = vst [vmem:[%s6 + $0x8] sm:$0xf] %v534
  %551 = vst [vmem:[%s6 + $0xc] sm:$0xf] %v535
  %552 = vst [vmem:[%s6 + $0x10] sm:$0xf] %v536
  %553 = vst [vmem:[%s6 + $0x14] sm:$0xf] %v537
  %554 = vst [vmem:[%s6 + $0x18] sm:$0xf] %v538
  %555 = vst [vmem:[%s6 + $0x1c] sm:$0xf] %v539
  %556 = vst [vmem:[%s6 + $0x20] sm:$0xf] %v540
  %557 = vst [vmem:[%s6 + $0x24] sm:$0xf] %v541
  %558 = vst [vmem:[%s6 + $0x28] sm:$0xf] %v542
  %559 = vst [vmem:[%s6 + $0x2c] sm:$0xf] %v543
  %560 = vst [vmem:[%s6 + $0x30] sm:$0xf] %v544
  %561 = vst [vmem:[%s6 + $0x34] sm:$0xf] %v545
  %562 = vst [vmem:[%s6 + $0x38] sm:$0xf] %v546
  %563 = vst [vmem:[%s6 + $0x3c] sm:$0xf] %v547
  // Predicated region
  $region41: #{forward.1} parent=0 // pred_check
    _
  $region42: #{forward.1} parent=0 // pred_check_branch
    %565 = sbr.rel (0) target = $region44
  $region43: #{forward.1} parent=0 // pred_region
    _
  $region44: #{forward.1} parent=0 // pred_fallthru
    _
  // Predicated region
  $region45: #{forward.1} parent=0 // pred_check
    _
  $region46: #{forward.1} parent=0 // pred_check_branch
    %567 = sbr.rel (0) target = $region48
  $region47: #{forward.1} parent=0 // pred_region
    _
  $region48: #{forward.1} parent=0 // pred_fallthru
    _
  %568 = vsyncmov [#allocation3]
  %s569 = vpop.sfrf %568
  %p570 = scmp.eq.s32.totalorder %s569, 0
  %p571 = pneg %p570
  %573 = shalt.err (%p571)

</llo_original>
